<compile_context>
chip_gen: v7x
topology: tpu7x:2x2x1
jax: 0.10.0
libtpu: 0.0.40
codegen_flags: <defaults>
</compile_context>

<pallas_src>
import jax
import jax.numpy as jnp
from jax import lax
from jax.experimental import pallas as pl
from jax.experimental.pallas import tpu as pltpu


_LANES = 128
_ACC_ROWS = 512                        # (512, 128) f32 accumulator block = 256 KiB
_ROW_QUANTUM = 32                      # 32 sublanes: safe row multiple for f32/bf16/int8
_ELEM_QUANTUM = _ROW_QUANTUM * _LANES  # 4096 elements
_MAX_1D_BLOCK_BYTES = 1 << 20          # rank-1 (n % 128 != 0) path keeps blocks modest
_DEFAULT_MIN_PALLAS_ELEMS = 512 * 1024


def _round_down(x: int, m: int) -> int:
    return (x // m) * m


def _hw_defaults():
    """(bytes per input per streamed block, vmem_limit_bytes), generation aware."""
    try:
        vmem_bytes = int(pltpu.get_tpu_info().vmem_capacity_bytes)
    except Exception:  # query unavailable -> conservative defaults
        vmem_bytes = 64 << 20
    if vmem_bytes <= (64 << 20):
        # v7x: 64 MiB VMEM per TensorCore, 32 MiB scoped default.
        # Streaming VMEM: 2 inputs x 2 pipeline buffers x 4 MiB = 16 MiB.
        return 4 << 20, 32 << 20
    # v5e / v6e: 128 MiB VMEM; raise the scoped limit (v5e's default is only 16 MiB).
    return 8 << 20, 64 << 20


def _make_partial_sum_kernel(chunks: int, chunk_units: int, two_d: bool):
    """Builds kernel(lots_ref, pd_ref, out_ref): out_ref += chunked sum of lots * pd.

    The accumulator is the kernel *output* (its block index is constant over the
    reduction grid axis, so it stays resident in VMEM and is written back once).
    Each streamed block is consumed in `chunks` chunks of `chunk_units` rows (2-D)
    or elements (1-D) so f32 intermediates stay ~256 KiB regardless of block size.
    """

    def kernel(lots_ref, pd_ref, out_ref):
        step = pl.program_id(0)

        @pl.when(step == 0)
        def _init():
            out_ref[...] = jnp.zeros_like(out_ref)

        if chunks == 1:
            out_ref[...] += (lots_ref[...].astype(jnp.float32) *
                            pd_ref[...].astype(jnp.float32))
            return

        def body(j, carry):
            start = pl.multiple_of(j * chunk_units, chunk_units)
            sl = pl.ds(start, chunk_units)
            idx = (sl, slice(None)) if two_d else (sl,)
            out_ref[...] += (lots_ref[idx].astype(jnp.float32) *
                            pd_ref[idx].astype(jnp.float32))
            return carry

        lax.fori_loop(0, chunks, body, 0)

    return kernel


def _partial_sums_2d(lots2d, pd2d, blk_rows, acc_rows, chunks, steps,
                     vmem_limit_bytes):
    # NOTE: pipeline_mode=pl.Buffered(3) on the input specs is a possible
    # few-percent win if a trace shows exposed DMA at step boundaries; left at
    # the default double-buffering since it cannot be measured here.
    kernel = _make_partial_sum_kernel(chunks, acc_rows, two_d=True)
    in_spec = pl.BlockSpec((blk_rows, _LANES), lambda i: (i, 0))
    return pl.pallas_call(
        kernel,
        out_shape=jax.ShapeDtypeStruct((acc_rows, _LANES), jnp.float32),
        grid=(steps,),
        in_specs=[in_spec, in_spec],
        out_specs=pl.BlockSpec((acc_rows, _LANES), lambda i: (0, 0)),
        compiler_params=pltpu.CompilerParams(
            dimension_semantics=("arbitrary",),
            vmem_limit_bytes=vmem_limit_bytes),
    )(lots2d, pd2d)


def _partial_sums_1d(lots1d, pd1d, blk, steps, vmem_limit_bytes):
    kernel = _make_partial_sum_kernel(1, blk, two_d=False)
    in_spec = pl.BlockSpec((blk,), lambda i: (i,))
    return pl.pallas_call(
        kernel,
        out_shape=jax.ShapeDtypeStruct((blk,), jnp.float32),
        grid=(steps,),
        in_specs=[in_spec, in_spec],
        out_specs=pl.BlockSpec((blk,), lambda i: (0,)),
        compiler_params=pltpu.CompilerParams(
            dimension_semantics=("arbitrary",),
            vmem_limit_bytes=vmem_limit_bytes),
    )(lots1d, pd1d)


def negative_mean_return_loss(lots, price_diff, *, block_bytes=None,
                              vmem_limit_bytes=None,
                              min_pallas_elems=_DEFAULT_MIN_PALLAS_ELEMS):
    """Computes -mean(lots.reshape(-1) * price_diff), accumulated in float32."""
    lots_flat = lots.reshape(-1)
    pd_flat = price_diff.reshape(-1)
    if lots_flat.shape != pd_flat.shape:
        raise ValueError(
            "lots.view(-1) must have the same number of elements as price_diff")
    n = lots_flat.shape[0]

    def xla_sum(a, b):
        return jnp.sum(a.astype(jnp.float32) * b.astype(jnp.float32))

    default_block_bytes, default_vmem_limit = _hw_defaults()
    if block_bytes is None:
        block_bytes = default_block_bytes
    if vmem_limit_bytes is None:
        vmem_limit_bytes = default_vmem_limit
    itemsize = max(jnp.dtype(lots_flat.dtype).itemsize,
                   jnp.dtype(pd_flat.dtype).itemsize)

    total = None
    if n >= max(min_pallas_elems, 1):
        if n % _LANES == 0:
            # Zero-copy lane-dense layout: (rows, 128).
            rows = n // _LANES
            blk_rows = max(_ROW_QUANTUM,
                           _round_down(block_bytes // (_LANES * itemsize),
                                       _ROW_QUANTUM))
            acc_rows = min(_ACC_ROWS, blk_rows)
            blk_rows = _round_down(blk_rows, acc_rows)
            steps = rows // blk_rows
            if steps > 0:
                lots2d = lots_flat.reshape(rows, _LANES)
                pd2d = pd_flat.reshape(rows, _LANES)
                partials = _partial_sums_2d(lots2d, pd2d, blk_rows, acc_rows,
                                            blk_rows // acc_rows, steps,
                                            vmem_limit_bytes)
                total = jnp.sum(partials)
                done_rows = steps * blk_rows
                if done_rows < rows:  # < one block of tail rows: fused XLA
                    total = total + xla_sum(lots2d[done_rows:], pd2d[done_rows:])
        else:
            # n not a multiple of 128: rank-1 streaming, still zero-copy.
            blk = max(_ELEM_QUANTUM,
                      _round_down(min(block_bytes, _MAX_1D_BLOCK_BYTES) // itemsize,
                                  _ELEM_QUANTUM))
            steps = n // blk
            if steps > 0:
                partials = _partial_sums_1d(lots_flat, pd_flat, blk, steps,
                                            vmem_limit_bytes)
                total = jnp.sum(partials)
                done = steps * blk
                if done < n:
                    total = total + xla_sum(lots_flat[done:], pd_flat[done:])

    if total is None:
        # Tiny / sub-block input: a pallas_call is pure launch overhead.
        total = xla_sum(lots_flat, pd_flat)

    return -(total / jnp.float32(n))


def _reference(lots, price_diff):
    return -jnp.mean(lots.reshape(-1).astype(jnp.float32) *
                     price_diff.reshape(-1).astype(jnp.float32))


if __name__ == "__main__":
    key = jax.random.PRNGKey(0)
    ks = jax.random.split(key, 8)

    # 1) f32, n % 128 == 0 -> 2-D path; 64 KiB blocks force a 4-step
    #    accumulation grid plus a 38-row XLA tail (no padding anywhere).
    lots1 = jax.random.normal(ks[0], (550, 128), dtype=jnp.float32)
    pd1 = jax.random.normal(ks[1], (550 * 128,), dtype=jnp.float32)
    out1 = negative_mean_return_loss(lots1, pd1, block_bytes=64 * 1024,
                                     min_pallas_elems=0)
    ref1 = _reference(lots1, pd1)
    assert jnp.allclose(out1, ref1, rtol=1e-4, atol=1e-5), (out1, ref1)

    # 2) bf16 streamed natively (upcast in-kernel); 512 KiB blocks -> 2 grid
    #    steps x 4 in-kernel chunks (fori_loop path) + 300-row XLA tail.
    lots2 = jax.random.normal(ks[2], (4396, 128), dtype=jnp.bfloat16)
    pd2 = jax.random.normal(ks[3], (4396 * 128,), dtype=jnp.bfloat16)
    out2 = negative_mean_return_loss(lots2, pd2, block_bytes=512 * 1024,
                                     min_pallas_elems=0)
    ref2 = _reference(lots2, pd2)
    assert jnp.allclose(out2, ref2, rtol=1e-3, atol=1e-4), (out2, ref2)

    # 3) n NOT a multiple of 128 -> zero-copy rank-1 path (9 steps + element tail).
    lots3 = jax.random.normal(ks[4], (5, 120413), dtype=jnp.float32)
    pd3 = jax.random.normal(ks[5], (5 * 120413,), dtype=jnp.float32)
    out3 = negative_mean_return_loss(lots3, pd3, block_bytes=256 * 1024,
                                     min_pallas_elems=0)
    ref3 = _reference(lots3, pd3)
    assert jnp.allclose(out3, ref3, rtol=1e-4, atol=1e-5), (out3, ref3)

    # 4) Default generation-aware sizing under jit: large enough to engage the
    #    streaming kernel with its real 4-8 MiB blocks + default vmem limit.
    lots4 = jax.random.normal(ks[6], (17408, 128), dtype=jnp.float32)
    pd4 = jax.random.normal(ks[7], (17408 * 128,), dtype=jnp.float32)
    out4 = jax.jit(negative_mean_return_loss)(lots4, pd4)
    ref4 = _reference(lots4, pd4)
    assert jnp.allclose(out4, ref4, rtol=1e-4, atol=1e-5), (out4, ref4)

    # 5) Tiny input takes the fused-XLA fast path (no kernel launch).
    lots5 = jax.random.normal(ks[0], (8, 16), dtype=jnp.float32)
    pd5 = jax.random.normal(ks[1], (128,), dtype=jnp.float32)
    out5 = negative_mean_return_loss(lots5, pd5)
    ref5 = _reference(lots5, pd5)
    assert jnp.allclose(out5, ref5, rtol=1e-5, atol=1e-6), (out5, ref5)

    jax.block_until_ready((out1, out2, out3, out4, out5))
    print("KERNEL_OK")
</pallas_src>

<mosaic_0001>
module attributes {stable_mosaic.version = 11 : i64} {
  func.func @kernel(%arg0: i32, %arg1: memref<128x128xf32, #tpu.memory_space<vmem>>, %arg2: memref<128x128xf32, #tpu.memory_space<vmem>>, %arg3: memref<128x128xf32, #tpu.memory_space<vmem>>) attributes {dimension_semantics = [#tpu.dimension_semantics<arbitrary>], iteration_bounds = array<i64: 4>, scalar_prefetch = 0 : i64, scratch_operands = 0 : i64, tpu.core_type = #tpu.core_type<tc>, window_params = [{transform_indices = @transform_0, window_bounds = array<i64: 128, 128>}, {transform_indices = @transform_1, window_bounds = array<i64: 128, 128>}, {pipeline_mode = #tpu.pipeline_mode<synchronous>, transform_indices = @transform_2, window_bounds = array<i64: 128, 128>}]} {
    %c0_i32 = arith.constant 0 : i32
    %0 = arith.cmpi eq, %arg0, %c0_i32 : i32
    %1 = arith.extui %0 : i1 to i32
    %c0_i32_0 = arith.constant 0 : i32
    %2 = arith.cmpi ne, %1, %c0_i32_0 : i32
    scf.if %2 {
      %cst = arith.constant 0.000000e+00 : f32
      %9 = vector.broadcast %cst : f32 to vector<128x128xf32>
      %c0_8 = arith.constant 0 : index
      %c0_9 = arith.constant 0 : index
      %10 = vector.load %arg3[%c0_8, %c0_9] : memref<128x128xf32, #tpu.memory_space<vmem>>, vector<128x128xf32>
      tpu.vector_store %arg3[%c0_8, %c0_9], %9 {strides = array<i32>} : memref<128x128xf32, #tpu.memory_space<vmem>>, vector<128x128xf32>,
    } else {
    }
    %c0 = arith.constant 0 : index
    %c0_1 = arith.constant 0 : index
    %3 = vector.load %arg3[%c0, %c0_1] : memref<128x128xf32, #tpu.memory_space<vmem>>, vector<128x128xf32>
    %c0_2 = arith.constant 0 : index
    %c0_3 = arith.constant 0 : index
    %4 = vector.load %arg1[%c0_2, %c0_3] : memref<128x128xf32, #tpu.memory_space<vmem>>, vector<128x128xf32>
    %c0_4 = arith.constant 0 : index
    %c0_5 = arith.constant 0 : index
    %5 = vector.load %arg2[%c0_4, %c0_5] : memref<128x128xf32, #tpu.memory_space<vmem>>, vector<128x128xf32>
    %6 = arith.mulf %4, %5 : vector<128x128xf32>
    %7 = arith.addf %3, %6 : vector<128x128xf32>
    %c0_6 = arith.constant 0 : index
    %c0_7 = arith.constant 0 : index
    %8 = vector.load %arg3[%c0_6, %c0_7] : memref<128x128xf32, #tpu.memory_space<vmem>>, vector<128x128xf32>
    tpu.vector_store %arg3[%c0_6, %c0_7], %7 {strides = array<i32>} : memref<128x128xf32, #tpu.memory_space<vmem>>, vector<128x128xf32>,
    return
  }
  func.func @transform_0(%arg0: i32) -> (i32, i32) {
    %c0_i32 = arith.constant 0 : i32
    %c0_i32_0 = arith.constant 0 : i32
    return %arg0, %c0_i32 : i32, i32
  }
  func.func @transform_1(%arg0: i32) -> (i32, i32) {
    %c0_i32 = arith.constant 0 : i32
    %c0_i32_0 = arith.constant 0 : i32
    return %arg0, %c0_i32 : i32, i32
  }
  func.func @transform_2(%arg0: i32) -> (i32, i32) {
    %c0_i32 = arith.constant 0 : i32
    %c0_i32_0 = arith.constant 0 : i32
    %c0_i32_1 = arith.constant 0 : i32
    return %c0_i32, %c0_i32_0 : i32, i32
  }
}

</mosaic_0001>

<llo_original>
// kernel: tpu_custom_call.1
$region0: #{tpu_custom_call.1}
  #allocation0 [shape = 'u32[]', space=smem, size = 0x4, offset = 0x4, fixed_abs, tag = 'smem constant byte address 0x4 - core index']
  #allocation1 [shape = 'u32[144,128]{1,0:T(1,128)}', space=vmem, size = 0x12000, scoped, tag = 'internal scratch']
  %s0 = inlined_call_operand.hbm [shape: f32[550,128], index: 0, kind: input, shape index: {}]
  %s1 = inlined_call_operand.hbm [shape: f32[550,128], index: 1, kind: input, shape index: {}]
  %s2 = inlined_call_operand.hbm [shape: f32[128,128], index: 2, kind: output, shape index: {}]
  %s3 = sld [smem:[#allocation0]]
  $region53: #{tpu_custom_call.1} parent=0
    _
  %s5 = ssub.s32 1, %s3
  %s6 = scalar_select 0, %s5, %s3
  $region1: #{tpu_custom_call.1} parent=0
    #allocation2 [shape = 'u8[131072]{0}', space=vmem, size = 0x20000, scoped, tag = 'input window, operand 0']
    #allocation3 [shape = 's32[2]{0}', space=sflag, size = 0x8, scoped, tag = 'scoped memory for tpu_custom_call.1']
    #allocation4 [shape = 's32[2]{0}', space=sflag, size = 0x8, scoped, tag = 'scoped memory for tpu_custom_call.1']
    #allocation5 [shape = 'u8[131072]{0}', space=vmem, size = 0x20000, scoped, tag = 'input window, operand 1']
    #allocation6 [shape = 's32[2]{0}', space=sflag, size = 0x8, scoped, tag = 'scoped memory for tpu_custom_call.1']
    #allocation7 [shape = 'u8[65536]{0}', space=vmem, size = 0x10000, scoped, tag = 'output window, operand 0, single buffered']
    %7 = vsyncpa [#allocation3], 0
    %s8 = scalar_lea.sflag [#allocation3], 1
    %9 = vsyncpa %s8, 0
    %10 = vsyncpa [#allocation6], 0
    %s11 = scalar_lea.sflag [#allocation6], 1
    %12 = vsyncpa %s11, 0
    %13 = vsyncpa [#allocation4], 0
    loop: start=0, step=1, limit=6
    $region2: #{tpu_custom_call.1} parent=1 // loop_pre_header
      _
    $region3: #{tpu_custom_call.1} parent=1 // loop_header
      %s15 = sphi 0, %s19
      %p16 = scmp.ge.s32.totalorder %s15, 6
      %s25 = sphi 0, %s27
      %s28 = sphi 0, %s25
      %s29 = sphi 0, %s28
      %s45 = sphi 0, %s29
      %s51 = sphi 0, %s53
      %s54 = sphi 0, %s51
      %s55 = sphi 0, %s54
      %s71 = sphi 0, %s55
      %s75 = sphi 0, %s75
      %s77 = sphi 0, %s75
      %s78 = sphi 0, %s77
      %s92 = sphi 0, %s78
    $region4: #{tpu_custom_call.1} parent=1 // loop_header_branch
      %18 = sbr.rel (%p16) target = $region8
    $region5: #{tpu_custom_call.1} parent=1 // loop_body
      %s20 = ssub.s32 %s15, 1
      %s21 = ssub.s32 %s15, 2
      %s22 = sadd.s32 %s15, 1
      %s23 = ssub.s32 %s15, %s22
      %p24 = scmp.eq.s32.totalorder %s23, 0
      %s26 = sadd.s32 %s25, 1
      %s27 = scalar_select %p24, %s25, %s26
      %p30 = pneg %p24
      %p31 = scmp.eq.s32.totalorder %s15, 3
      %p32 = por %p30, %p31
      %p33 = scmp.ne.s32.totalorder %s25, %s28
      %p34 = scmp.eq.s32.totalorder %s15, 0
      %p35 = por %p33, %p34
      %p36 = scmp.ne.s32.totalorder %s25, %s28
      %p37 = scmp.eq.s32.totalorder %s20, 3
      %p38 = por %p36, %p37
      %p39 = scmp.ne.s32.totalorder %s28, %s29
      %p40 = scmp.eq.s32.totalorder %s20, 0
      %p41 = por %p39, %p40
      %p42 = scmp.ne.s32.totalorder %s28, %s29
      %p43 = scmp.eq.s32.totalorder %s21, 3
      %p44 = por %p42, %p43
      %p46 = scmp.ne.s32.totalorder %s29, %s45
      %p47 = scmp.eq.s32.totalorder %s21, 0
      %p48 = por %p46, %p47
      %s49 = ssub.s32 %s15, %s22
      %p50 = scmp.eq.s32.totalorder %s49, 0
      %s52 = sadd.s32 %s51, 1
      %s53 = scalar_select %p50, %s51, %s52
      %p56 = pneg %p50
      %p57 = scmp.eq.s32.totalorder %s15, 3
      %p58 = por %p56, %p57
      %p59 = scmp.ne.s32.totalorder %s51, %s54
      %p60 = scmp.eq.s32.totalorder %s15, 0
      %p61 = por %p59, %p60
      %p62 = scmp.ne.s32.totalorder %s51, %s54
      %p63 = scmp.eq.s32.totalorder %s20, 3
      %p64 = por %p62, %p63
      %p65 = scmp.ne.s32.totalorder %s54, %s55
      %p66 = scmp.eq.s32.totalorder %s20, 0
      %p67 = por %p65, %p66
      %p68 = scmp.ne.s32.totalorder %s54, %s55
      %p69 = scmp.eq.s32.totalorder %s21, 3
      %p70 = por %p68, %p69
      %p72 = scmp.ne.s32.totalorder %s55, %s71
      %p73 = scmp.eq.s32.totalorder %s21, 0
      %p74 = por %p72, %p73
      %s76 = sadd.s32 %s75, 1
      %p79 = scmp.eq.s32.totalorder %s15, 3
      %p80 = scmp.ne.s32.totalorder %s75, %s77
      %p81 = scmp.eq.s32.totalorder %s15, 0
      %p82 = por %p80, %p81
      %p83 = scmp.ne.s32.totalorder %s75, %s77
      %p84 = scmp.eq.s32.totalorder %s20, 3
      %p85 = por %p83, %p84
      %p86 = scmp.ne.s32.totalorder %s77, %s78
      %p87 = scmp.eq.s32.totalorder %s20, 0
      %p88 = por %p86, %p87
      %p89 = scmp.ne.s32.totalorder %s77, %s78
      %p90 = scmp.eq.s32.totalorder %s21, 3
      %p91 = por %p89, %p90
      %p93 = scmp.ne.s32.totalorder %s78, %s92
      %p94 = scmp.eq.s32.totalorder %s21, 0
      %p95 = por %p93, %p94
      %p96 = scmp.le.s32.totalorder 1, %s15
      %p97 = scmp.lt.s32.totalorder %s15, 5
      %p98 = pnand %p96, %p97
      %p99 = pneg %p98
      // Predicated region
      $region9: #{tpu_custom_call.1} parent=5 // pred_check
        _
      $region10: #{tpu_custom_call.1} parent=5 // pred_check_branch
        %101 = sbr.rel (%p98) target = $region12
      $region11: #{tpu_custom_call.1} parent=5 // pred_region
        %s102 = ssub.s32 %s15, 1
      $region12: #{tpu_custom_call.1} parent=5 // pred_fallthru
        _
      %p103 = scmp.lt.s32.totalorder %s15, 4
      // Predicated region
      $region13: #{tpu_custom_call.1} parent=5 // pred_check
        %p104 = pneg %p103
      $region14: #{tpu_custom_call.1} parent=5 // pred_check_branch
        %106 = sbr.rel (%p104) target = $region16
      $region15: #{tpu_custom_call.1} parent=5 // pred_region
        // Predicated region
        $region17: #{tpu_custom_call.1} parent=15 // pred_check
          %p107 = pneg %p35
        $region18: #{tpu_custom_call.1} parent=15 // pred_check_branch
          %109 = sbr.rel (%p107) target = $region20
        $region19: #{tpu_custom_call.1} parent=15 // pred_region
          %s110 = sand.u32 %s25, 1
          %s111 = scalar_lea.sflag [#allocation3], %s110
          %s112 = sand.u32 %s25, 1
          %s113 = smul.addr %s112, 128
          %s114 = scalar_lea.vmem [#allocation2], %s113
          %s115 = smul.u32 16, %s15
          %s116 = ssub.s32 69, %s115
          %p117 = scmp.lt.s32.totalorder %s116, 16
          %s118 = scalar_select %p117, %s116, 16
          %s119 = smul.u32 128, %s118
          %s121 = ssub.s32 2048, %s119
          %122 = vsyncadd %s111, %s121
          %p123 = scmp.ne.s32.totalorder 0, %s119
          %s124 = smul.addr %s115, 128
          %s125 = scalar_lea.hbm %s0, %s124
          %s126 = smul.u32 8, %s118
          %s127 = sshll.u32 %s114, 4
          %s128 = int_to_ptr.vmem [resolvable:$true] %s127
          %s129 = sshll.u32 %s126, 4
          %133 = dma.hbm_to_vmem [thread:$0]  (%p123), %s125, %s129, %s128, %s111, 128, 128, 8
        $region20: #{tpu_custom_call.1} parent=15 // pred_fallthru
          _
        // Predicated region
        $region21: #{tpu_custom_call.1} parent=15 // pred_check
          %p134 = pneg %p61
        $region22: #{tpu_custom_call.1} parent=15 // pred_check_branch
          %136 = sbr.rel (%p134) target = $region24
        $region23: #{tpu_custom_call.1} parent=15 // pred_region
          %s137 = sand.u32 %s51, 1
          %s138 = scalar_lea.sflag [#allocation6], %s137
          %s139 = sand.u32 %s51, 1
          %s140 = smul.addr %s139, 128
          %s141 = scalar_lea.vmem [#allocation5], %s140
          %s142 = smul.u32 16, %s15
          %s143 = ssub.s32 69, %s142
          %p144 = scmp.lt.s32.totalorder %s143, 16
          %s145 = scalar_select %p144, %s143, 16
          %s146 = smul.u32 128, %s145
          %s148 = ssub.s32 2048, %s146
          %149 = vsyncadd %s138, %s148
          %p150 = scmp.ne.s32.totalorder 0, %s146
          %s151 = smul.addr %s142, 128
          %s152 = scalar_lea.hbm %s1, %s151
          %s153 = smul.u32 8, %s145
          %s154 = sshll.u32 %s141, 4
          %s155 = int_to_ptr.vmem [resolvable:$true] %s154
          %s156 = sshll.u32 %s153, 4
          %160 = dma.hbm_to_vmem [thread:$0]  (%p150), %s152, %s156, %s155, %s138, 128, 128, 8
        $region24: #{tpu_custom_call.1} parent=15 // pred_fallthru
          _
      $region16: #{tpu_custom_call.1} parent=5 // pred_fallthru
        _
      %p161 = scmp.le.s32.totalorder 1, %s15
      %p162 = scmp.lt.s32.totalorder %s15, 5
      %p163 = pnand %p161, %p162
      %p164 = pneg %p163
      // Predicated region
      $region25: #{tpu_custom_call.1} parent=5 // pred_check
        _
      $region26: #{tpu_custom_call.1} parent=5 // pred_check_branch
        %166 = sbr.rel (%p163) target = $region28
      $region27: #{tpu_custom_call.1} parent=5 // pred_region
        %s167 = ssub.s32 %s15, 1
        %s168 = sand.u32 %s28, 1
        %s169 = scalar_lea.sflag [#allocation3], %s168
        %s170 = sand.u32 %s28, 1
        %s171 = smul.addr %s170, 128
        %s172 = scalar_lea.vmem [#allocation2], %s171
        // Predicated region
        $region29: #{tpu_custom_call.1} parent=27 // pred_check
          %p173 = pneg %p41
        $region30: #{tpu_custom_call.1} parent=27 // pred_check_branch
          %175 = sbr.rel (%p173) target = $region32
        $region31: #{tpu_custom_call.1} parent=27 // pred_region
          %176 = dma.done %s169, 2048
        $region32: #{tpu_custom_call.1} parent=27 // pred_fallthru
          _
        %s177 = sand.u32 %s54, 1
        %s178 = scalar_lea.sflag [#allocation6], %s177
        %s179 = sand.u32 %s54, 1
        %s180 = smul.addr %s179, 128
        %s181 = scalar_lea.vmem [#allocation5], %s180
        // Predicated region
        $region33: #{tpu_custom_call.1} parent=27 // pred_check
          %p182 = pneg %p67
        $region34: #{tpu_custom_call.1} parent=27 // pred_check_branch
          %184 = sbr.rel (%p182) target = $region36
        $region35: #{tpu_custom_call.1} parent=27 // pred_region
          %185 = dma.done %s178, 2048
        $region36: #{tpu_custom_call.1} parent=27 // pred_fallthru
          _
        %s186 = sand.u32 %s28, 1
        %s187 = scalar_lea.sflag [#allocation3], %s186
        %s188 = sand.u32 %s28, 1
        %s189 = smul.addr %s188, 128
        %s190 = scalar_lea.vmem [#allocation2], %s189
        %p191 = pneg %p41
        %p192 = pneg %p38
        %s193 = sand.u32 %s54, 1
        %s194 = scalar_lea.sflag [#allocation6], %s193
        %s195 = sand.u32 %s54, 1
        %s196 = smul.addr %s195, 128
        %s197 = scalar_lea.vmem [#allocation5], %s196
        %p198 = pneg %p67
        %p199 = pneg %p64
        %p200 = pneg %p88
        %p201 = pneg %p85
        %s202 = smul.u32 16, %s20
        %s203 = ssub.s32 69, %s202
        %p204 = scmp.lt.s32.totalorder %s203, 16
        %s205 = scalar_select %p204, %s203, 16
        %s206 = smul.u32 128, %s205
        %s207 = smul.u32 16, %s20
        %s208 = ssub.s32 69, %s207
        %p209 = scmp.lt.s32.totalorder %s208, 16
        %s210 = scalar_select %p209, %s208, 16
        %s211 = smul.u32 128, %s210
        %p212 = scmp.eq.s32.totalorder %s20, 0
        // Predicated region
        $region37: #{tpu_custom_call.1} parent=27 // pred_check
          %p213 = pneg %p212
        $region38: #{tpu_custom_call.1} parent=27 // pred_check_branch
          %215 = sbr.rel (%p213) target = $region40
        $region39: #{tpu_custom_call.1} parent=27 // pred_region
          %216 = vst [vmem:[#allocation7] sm:$0xff] 0.0
          %217 = vst [vmem:[#allocation7 + $0x8] sm:$0xff] 0.0
          %218 = vst [vmem:[#allocation7 + $0x10] sm:$0xff] 0.0
          %219 = vst [vmem:[#allocation7 + $0x18] sm:$0xff] 0.0
          %220 = vst [vmem:[#allocation7 + $0x20] sm:$0xff] 0.0
          %221 = vst [vmem:[#allocation7 + $0x28] sm:$0xff] 0.0
          %222 = vst [vmem:[#allocation7 + $0x30] sm:$0xff] 0.0
          %223 = vst [vmem:[#allocation7 + $0x38] sm:$0xff] 0.0
          %224 = vst [vmem:[#allocation7 + $0x40] sm:$0xff] 0.0
          %225 = vst [vmem:[#allocation7 + $0x48] sm:$0xff] 0.0
          %226 = vst [vmem:[#allocation7 + $0x50] sm:$0xff] 0.0
          %227 = vst [vmem:[#allocation7 + $0x58] sm:$0xff] 0.0
          %228 = vst [vmem:[#allocation7 + $0x60] sm:$0xff] 0.0
          %229 = vst [vmem:[#allocation7 + $0x68] sm:$0xff] 0.0
          %230 = vst [vmem:[#allocation7 + $0x70] sm:$0xff] 0.0
          %231 = vst [vmem:[#allocation7 + $0x78] sm:$0xff] 0.0
        $region40: #{tpu_custom_call.1} parent=27 // pred_fallthru
          _
        %v232 = vld [vmem:[#allocation7] sm:$0xff]
        %v233 = vld [vmem:[#allocation7 + $0x8] sm:$0xff]
        %v234 = vld [vmem:[#allocation7 + $0x10] sm:$0xff]
        %v235 = vld [vmem:[#allocation7 + $0x18] sm:$0xff]
        %v236 = vld [vmem:[#allocation7 + $0x20] sm:$0xff]
        %v237 = vld [vmem:[#allocation7 + $0x28] sm:$0xff]
        %v238 = vld [vmem:[#allocation7 + $0x30] sm:$0xff]
        %v239 = vld [vmem:[#allocation7 + $0x38] sm:$0xff]
        %v240 = vld [vmem:[#allocation7 + $0x40] sm:$0xff]
        %v241 = vld [vmem:[#allocation7 + $0x48] sm:$0xff]
        %v242 = vld [vmem:[#allocation7 + $0x50] sm:$0xff]
        %v243 = vld [vmem:[#allocation7 + $0x58] sm:$0xff]
        %v244 = vld [vmem:[#allocation7 + $0x60] sm:$0xff]
        %v245 = vld [vmem:[#allocation7 + $0x68] sm:$0xff]
        %v246 = vld [vmem:[#allocation7 + $0x70] sm:$0xff]
        %v247 = vld [vmem:[#allocation7 + $0x78] sm:$0xff]
        %v248 = vld [vmem:[%s172] sm:$0xff]
        %v249 = vld [vmem:[%s172 + $0x8] sm:$0xff]
        %v250 = vld [vmem:[%s172 + $0x10] sm:$0xff]
        %v251 = vld [vmem:[%s172 + $0x18] sm:$0xff]
        %v252 = vld [vmem:[%s172 + $0x20] sm:$0xff]
        %v253 = vld [vmem:[%s172 + $0x28] sm:$0xff]
        %v254 = vld [vmem:[%s172 + $0x30] sm:$0xff]
        %v255 = vld [vmem:[%s172 + $0x38] sm:$0xff]
        %v256 = vld [vmem:[%s172 + $0x40] sm:$0xff]
        %v257 = vld [vmem:[%s172 + $0x48] sm:$0xff]
        %v258 = vld [vmem:[%s172 + $0x50] sm:$0xff]
        %v259 = vld [vmem:[%s172 + $0x58] sm:$0xff]
        %v260 = vld [vmem:[%s172 + $0x60] sm:$0xff]
        %v261 = vld [vmem:[%s172 + $0x68] sm:$0xff]
        %v262 = vld [vmem:[%s172 + $0x70] sm:$0xff]
        %v263 = vld [vmem:[%s172 + $0x78] sm:$0xff]
        %v264 = vld [vmem:[%s181] sm:$0xff]
        %v265 = vld [vmem:[%s181 + $0x8] sm:$0xff]
        %v266 = vld [vmem:[%s181 + $0x10] sm:$0xff]
        %v267 = vld [vmem:[%s181 + $0x18] sm:$0xff]
        %v268 = vld [vmem:[%s181 + $0x20] sm:$0xff]
        %v269 = vld [vmem:[%s181 + $0x28] sm:$0xff]
        %v270 = vld [vmem:[%s181 + $0x30] sm:$0xff]
        %v271 = vld [vmem:[%s181 + $0x38] sm:$0xff]
        %v272 = vld [vmem:[%s181 + $0x40] sm:$0xff]
        %v273 = vld [vmem:[%s181 + $0x48] sm:$0xff]
        %v274 = vld [vmem:[%s181 + $0x50] sm:$0xff]
        %v275 = vld [vmem:[%s181 + $0x58] sm:$0xff]
        %v276 = vld [vmem:[%s181 + $0x60] sm:$0xff]
        %v277 = vld [vmem:[%s181 + $0x68] sm:$0xff]
        %v278 = vld [vmem:[%s181 + $0x70] sm:$0xff]
        %v279 = vld [vmem:[%s181 + $0x78] sm:$0xff]
        %v280 = vmul.f32 %v248, %v264
        %v281 = vmul.f32 %v249, %v265
        %v282 = vmul.f32 %v250, %v266
        %v283 = vmul.f32 %v251, %v267
        %v284 = vmul.f32 %v252, %v268
        %v285 = vmul.f32 %v253, %v269
        %v286 = vmul.f32 %v254, %v270
        %v287 = vmul.f32 %v255, %v271
        %v288 = vmul.f32 %v256, %v272
        %v289 = vmul.f32 %v257, %v273
        %v290 = vmul.f32 %v258, %v274
        %v291 = vmul.f32 %v259, %v275
        %v292 = vmul.f32 %v260, %v276
        %v293 = vmul.f32 %v261, %v277
        %v294 = vmul.f32 %v262, %v278
        %v295 = vmul.f32 %v263, %v279
        %v296 = vadd.f32 %v232, %v280
        %v297 = vadd.f32 %v233, %v281
        %v298 = vadd.f32 %v234, %v282
        %v299 = vadd.f32 %v235, %v283
        %v300 = vadd.f32 %v236, %v284
        %v301 = vadd.f32 %v237, %v285
        %v302 = vadd.f32 %v238, %v286
        %v303 = vadd.f32 %v239, %v287
        %v304 = vadd.f32 %v240, %v288
        %v305 = vadd.f32 %v241, %v289
        %v306 = vadd.f32 %v242, %v290
        %v307 = vadd.f32 %v243, %v291
        %v308 = vadd.f32 %v244, %v292
        %v309 = vadd.f32 %v245, %v293
        %v310 = vadd.f32 %v246, %v294
        %v311 = vadd.f32 %v247, %v295
        %312 = vst [vmem:[#allocation7] sm:$0xff] %v296
        %313 = vst [vmem:[#allocation7 + $0x8] sm:$0xff] %v297
        %314 = vst [vmem:[#allocation7 + $0x10] sm:$0xff] %v298
        %315 = vst [vmem:[#allocation7 + $0x18] sm:$0xff] %v299
        %316 = vst [vmem:[#allocation7 + $0x20] sm:$0xff] %v300
        %317 = vst [vmem:[#allocation7 + $0x28] sm:$0xff] %v301
        %318 = vst [vmem:[#allocation7 + $0x30] sm:$0xff] %v302
        %319 = vst [vmem:[#allocation7 + $0x38] sm:$0xff] %v303
        %320 = vst [vmem:[#allocation7 + $0x40] sm:$0xff] %v304
        %321 = vst [vmem:[#allocation7 + $0x48] sm:$0xff] %v305
        %322 = vst [vmem:[#allocation7 + $0x50] sm:$0xff] %v306
        %323 = vst [vmem:[#allocation7 + $0x58] sm:$0xff] %v307
        %324 = vst [vmem:[#allocation7 + $0x60] sm:$0xff] %v308
        %325 = vst [vmem:[#allocation7 + $0x68] sm:$0xff] %v309
        %326 = vst [vmem:[#allocation7 + $0x70] sm:$0xff] %v310
        %327 = vst [vmem:[#allocation7 + $0x78] sm:$0xff] %v311
        // Predicated region
        $region41: #{tpu_custom_call.1} parent=27 // pred_check
          %p328 = pneg %p85
        $region42: #{tpu_custom_call.1} parent=27 // pred_check_branch
          %330 = sbr.rel (%p328) target = $region44
        $region43: #{tpu_custom_call.1} parent=27 // pred_region
          %s332 = ssub.s32 2048, 2048
          %333 = vsyncadd [#allocation4], %s332
          %s334 = sshll.u32 [#allocation7], 4
          %s335 = int_to_ptr.vmem [resolvable:$true] %s334
          %340 = dma.vmem_to_hbm [thread:$0]  %s335, 2048, %s2, [#allocation4], 128, 128, 8
        $region44: #{tpu_custom_call.1} parent=27 // pred_fallthru
          _
        // Predicated region
        $region45: #{tpu_custom_call.1} parent=27 // pred_check
          %p341 = pneg %p85
        $region46: #{tpu_custom_call.1} parent=27 // pred_check_branch
          %343 = sbr.rel (%p341) target = $region48
        $region47: #{tpu_custom_call.1} parent=27 // pred_region
          %344 = dma.done [#allocation4], 2048
        $region48: #{tpu_custom_call.1} parent=27 // pred_fallthru
          _
      $region28: #{tpu_custom_call.1} parent=5 // pred_fallthru
        _
      %p345 = scmp.le.s32.totalorder 2, %s15
      // Predicated region
      $region49: #{tpu_custom_call.1} parent=5 // pred_check
        %p346 = pneg %p345
      $region50: #{tpu_custom_call.1} parent=5 // pred_check_branch
        %348 = sbr.rel (%p346) target = $region52
      $region51: #{tpu_custom_call.1} parent=5 // pred_region
        %s349 = ssub.s32 %s15, 2
      $region52: #{tpu_custom_call.1} parent=5 // pred_fallthru
        _
    $region6: #{tpu_custom_call.1} parent=1 // loop_footer
      %s19 = sadd.s32 1, %s15
    $region7: #{tpu_custom_call.1} parent=1 // loop_footer_branch
      %14 = sbr.rel target = $region3
    $region8: #{tpu_custom_call.1} parent=1 // loop_exit
      _
    %350 = vsyncpa [#allocation3], 1
    %s351 = scalar_lea.sflag [#allocation3], 1
    %352 = vsyncpa %s351, 1
    %353 = vsyncpa [#allocation6], 1
    %s354 = scalar_lea.sflag [#allocation6], 1
    %355 = vsyncpa %s354, 1
    %356 = vsyncpa [#allocation4], 1
    %s357 = scalar_lea.sflag [#allocation4], 1
    %358 = vsyncpa %s357, 1

</llo_original>
